<compile_context>
chip_gen: v5e
topology: v5e:2x2
jax: 0.10.0
libtpu: 0.0.40
codegen_flags: <defaults>
</compile_context>

<pallas_src>
import functools

import jax
import jax.numpy as jnp
from jax import lax
from jax.experimental import pallas as pl
from jax.experimental.pallas import tpu as pltpu

BN_EPS = 1e-5
LEAKY_SLOPE = 0.2
LANE = 128           # lane width
SUBLANE = 16         # bf16 sublane packing
VMEM_BUDGET = 12 * 1024 * 1024   # per-step working-set target (safe on v5e/v6e/v7x)
VMEM_LIMIT = 32 * 1024 * 1024    # explicit scoped-VMEM limit


def _round_up(x, m):
    return ((x + m - 1) // m) * m


# ----------------------------------------------------------------------------
# Pallas kernels
# ----------------------------------------------------------------------------
def matmul_act_kernel(x_ref, w_ref, o_ref, *, act):
    """One (tm, K) x (K, Coutp) tile of the im2col conv, activation fused."""
    y = jnp.dot(x_ref[...], w_ref[...], preferred_element_type=jnp.float32)
    if act == "leaky":
        y = jnp.where(y > 0, y, LEAKY_SLOPE * y)
    elif act == "sigmoid":
        # numerically stable sigmoid; reciprocal goes to the EUP slot.
        z = jnp.exp(-jnp.abs(y))
        num = jnp.where(y >= 0, 1.0, z)
        y = num * pl.reciprocal(1.0 + z, approx=True)
    o_ref[...] = y.astype(o_ref.dtype)


def matmul_stats_kernel(x_ref, w_ref, o_ref, sum_ref, sq_ref):
    """Conv matmul tile + fused per-channel sum / sum-of-squares epilogue."""
    y = jnp.dot(x_ref[...], w_ref[...], preferred_element_type=jnp.float32)
    o_ref[...] = y.astype(o_ref.dtype)

    @pl.when(pl.program_id(0) == 0)
    def _():
        sum_ref[...] = jnp.zeros_like(sum_ref)
        sq_ref[...] = jnp.zeros_like(sq_ref)

    sum_ref[...] += jnp.sum(y, axis=0, keepdims=True)
    sq_ref[...] += jnp.sum(y * y, axis=0, keepdims=True)


def bn_lrelu_kernel(x_ref, sum_ref, sq_ref, g_ref, b_ref, o_ref, *, count):
    """BatchNorm (batch statistics) + LeakyReLU(0.2) on one row tile."""
    inv_n = 1.0 / float(count)
    mean = sum_ref[...] * inv_n
    var = jnp.maximum(sq_ref[...] * inv_n - mean * mean, 0.0)
    scale = g_ref[...] * lax.rsqrt(var + BN_EPS)
    shift = b_ref[...] - mean * scale
    y = x_ref[...].astype(jnp.float32) * scale + shift
    o_ref[...] = jnp.where(y > 0, y, LEAKY_SLOPE * y).astype(o_ref.dtype)


# ----------------------------------------------------------------------------
# Wrappers (glue: im2col, padding, reshapes, parameter plumbing)
# ----------------------------------------------------------------------------
def _im2col(x_nhwc, k, stride, pad):
    n, h, w, c = x_nhwc.shape
    xp = jnp.pad(x_nhwc, ((0, 0), (pad, pad), (pad, pad), (0, 0)))
    ho = (h + 2 * pad - k) // stride + 1
    wo = (w + 2 * pad - k) // stride + 1
    patches = []
    for di in range(k):
        for dj in range(k):
            patches.append(
                xp[:, di:di + (ho - 1) * stride + 1:stride,
                      dj:dj + (wo - 1) * stride + 1:stride, :])
    # (N, Ho, Wo, k*k, C) -> flat K index = (di*k + dj)*C + c
    xc = jnp.stack(patches, axis=-2).reshape(n * ho * wo, k * k * c)
    return xc, (n, ho, wo)


def _pick_tm(m, kdim, coutp):
    """Largest row tile <= 512 whose per-step working set fits the budget."""
    tm = min(512, _round_up(m, SUBLANE))
    while tm > SUBLANE:
        est = (2 * tm * kdim * 2        # double-buffered bf16 activation tiles
               + 2 * kdim * coutp * 2   # bf16 weights (conservatively x2)
               + 2 * tm * coutp * 2)    # double-buffered bf16 output tiles
        if est <= VMEM_BUDGET:
            break
        tm = max(SUBLANE, _round_up(tm // 2, SUBLANE))
    return tm


def conv2d_pallas(x_nhwc, w_oihw, stride, pad, act="none", with_stats=False,
                  out_dtype=jnp.bfloat16):
    """Conv2d(kernel=4, bias=False) as im2col + tiled Pallas matmul."""
    cout, _, _, k = w_oihw.shape
    xcol, (n, ho, wo) = _im2col(x_nhwc, k, stride, pad)
    m, kdim = xcol.shape

    coutp = _round_up(cout, LANE)                       # lane-dense output
    wm = jnp.transpose(w_oihw, (2, 3, 1, 0)).reshape(kdim, cout)
    wm = jnp.pad(wm, ((0, 0), (0, coutp - cout))).astype(jnp.bfloat16)

    tm = _pick_tm(m, kdim, coutp)
    mpad = _round_up(m, tm)                             # never a giant fallback block
    xcol = jnp.pad(xcol, ((0, mpad - m), (0, 0))).astype(jnp.bfloat16)
    grid = (mpad // tm,)

    in_specs = [
        pl.BlockSpec((tm, kdim), lambda i: (i, 0)),
        pl.BlockSpec((kdim, coutp), lambda i: (0, 0)),  # weight stays resident
    ]
    y_spec = pl.BlockSpec((tm, coutp), lambda i: (i, 0))

    if with_stats:
        kern = matmul_stats_kernel
        out_shape = (jax.ShapeDtypeStruct((mpad, coutp), out_dtype),
                     jax.ShapeDtypeStruct((1, coutp), jnp.float32),
                     jax.ShapeDtypeStruct((1, coutp), jnp.float32))
        out_specs = (y_spec,
                     pl.BlockSpec((1, coutp), lambda i: (0, 0)),
                     pl.BlockSpec((1, coutp), lambda i: (0, 0)))
        dims = ("arbitrary",)          # stats accumulate across the row-tile axis
    else:
        kern = functools.partial(matmul_act_kernel, act=act)
        out_shape = jax.ShapeDtypeStruct((mpad, coutp), out_dtype)
        out_specs = y_spec
        dims = ("parallel",)           # independent row tiles (dual-TC on v7x)

    res = pl.pallas_call(
        kern,
        out_shape=out_shape,
        grid=grid,
        in_specs=in_specs,
        out_specs=out_specs,
        compiler_params=pltpu.CompilerParams(
            dimension_semantics=dims,
            vmem_limit_bytes=VMEM_LIMIT),
    )(xcol, wm)

    meta = dict(n=n, ho=ho, wo=wo, cout=cout, m=m, tm=tm)
    if with_stats:
        y_pad, sums, sqs = res
        return y_pad, (sums, sqs), meta
    return res, None, meta


def _unpad_reshape(y_pad, meta):
    n, ho, wo, cout, m = meta["n"], meta["ho"], meta["wo"], meta["cout"], meta["m"]
    return y_pad[:m, :cout].reshape(n, ho, wo, cout)


def batchnorm_leakyrelu_pallas(y_pad, stats, gamma, beta, meta):
    """Tiled BN (stats from the conv epilogue) + LeakyReLU, then unpad/reshape."""
    sums, sqs = stats
    mpad, coutp = y_pad.shape
    cout, tm = meta["cout"], meta["tm"]
    g = jnp.pad(gamma.astype(jnp.float32), (0, coutp - cout),
                constant_values=1.0).reshape(1, coutp)
    b = jnp.pad(beta.astype(jnp.float32), (0, coutp - cout)).reshape(1, coutp)

    out = pl.pallas_call(
        functools.partial(bn_lrelu_kernel, count=meta["m"]),
        out_shape=jax.ShapeDtypeStruct((mpad, coutp), jnp.bfloat16),
        grid=(mpad // tm,),
        in_specs=[
            pl.BlockSpec((tm, coutp), lambda i: (i, 0)),
            pl.BlockSpec((1, coutp), lambda i: (0, 0)),
            pl.BlockSpec((1, coutp), lambda i: (0, 0)),
            pl.BlockSpec((1, coutp), lambda i: (0, 0)),
            pl.BlockSpec((1, coutp), lambda i: (0, 0)),
        ],
        out_specs=pl.BlockSpec((tm, coutp), lambda i: (i, 0)),
        compiler_params=pltpu.CompilerParams(
            dimension_semantics=("parallel",),
            vmem_limit_bytes=VMEM_LIMIT),
    )(y_pad, sums, sqs, g, b)
    return _unpad_reshape(out, meta)


# ----------------------------------------------------------------------------
# Discriminator forward
# ----------------------------------------------------------------------------
def init_params(key, ndf, num_channels):
    ks = jax.random.split(key, 5)

    def conv_w(k, cout, cin):
        return jax.random.normal(k, (cout, cin, 4, 4), jnp.float32) * 0.05

    return {
        "w1": conv_w(ks[0], ndf, num_channels),
        "w2": conv_w(ks[1], ndf * 2, ndf),
        "g2": jnp.ones((ndf * 2,), jnp.float32), "b2": jnp.zeros((ndf * 2,), jnp.float32),
        "w3": conv_w(ks[2], ndf * 4, ndf * 2),
        "g3": jnp.ones((ndf * 4,), jnp.float32), "b3": jnp.zeros((ndf * 4,), jnp.float32),
        "w4": conv_w(ks[3], ndf * 8, ndf * 4),
        "g4": jnp.ones((ndf * 8,), jnp.float32), "b4": jnp.zeros((ndf * 8,), jnp.float32),
        "w5": conv_w(ks[4], 1, ndf * 8),
    }


def discriminator_forward(params, x_nchw):
    x = jnp.transpose(x_nchw, (0, 2, 3, 1)).astype(jnp.float32)   # NCHW -> NHWC

    # Conv1 + LeakyReLU (fused)                                   64 -> 32
    y, _, meta = conv2d_pallas(x, params["w1"], 2, 1, act="leaky")
    x = _unpad_reshape(y, meta)

    # Conv{2,3,4} (stats fused) + BatchNorm + LeakyReLU            32->16->8->4
    for wk, gk, bk in (("w2", "g2", "b2"), ("w3", "g3", "b3"), ("w4", "g4", "b4")):
        y, stats, meta = conv2d_pallas(x, params[wk], 2, 1, with_stats=True)
        x = batchnorm_leakyrelu_pallas(y, stats, params[gk], params[bk], meta)

    # Conv5 + Sigmoid (fused)                                      4 -> 1
    y, _, meta = conv2d_pallas(x, params["w5"], 1, 0, act="sigmoid",
                               out_dtype=jnp.float32)
    x = _unpad_reshape(y, meta)
    return jnp.transpose(x, (0, 3, 1, 2))                          # NHWC -> NCHW


# ----------------------------------------------------------------------------
# Pure-JAX f32 reference (for correctness check)
# ----------------------------------------------------------------------------
def _ref_conv(x_nhwc, w_oihw, stride, pad):
    return lax.conv_general_dilated(
        x_nhwc, jnp.transpose(w_oihw, (2, 3, 1, 0)),
        window_strides=(stride, stride), padding=[(pad, pad), (pad, pad)],
        dimension_numbers=("NHWC", "HWIO", "NHWC"))


def _ref_bn_lrelu(x, g, b):
    mean = jnp.mean(x, axis=(0, 1, 2), keepdims=True)
    var = jnp.mean((x - mean) ** 2, axis=(0, 1, 2), keepdims=True)
    y = (x - mean) * lax.rsqrt(var + BN_EPS) * g + b
    return jnp.where(y > 0, y, LEAKY_SLOPE * y)


def reference_forward(params, x_nchw):
    x = jnp.transpose(x_nchw, (0, 2, 3, 1))
    x = _ref_conv(x, params["w1"], 2, 1)
    x = jnp.where(x > 0, x, LEAKY_SLOPE * x)
    x = _ref_bn_lrelu(_ref_conv(x, params["w2"], 2, 1), params["g2"], params["b2"])
    x = _ref_bn_lrelu(_ref_conv(x, params["w3"], 2, 1), params["g3"], params["b3"])
    x = _ref_bn_lrelu(_ref_conv(x, params["w4"], 2, 1), params["g4"], params["b4"])
    x = jax.nn.sigmoid(_ref_conv(x, params["w5"], 1, 0))
    return jnp.transpose(x, (0, 3, 1, 2))


# ----------------------------------------------------------------------------
if __name__ == "__main__":
    key = jax.random.PRNGKey(0)
    k_in, k_par = jax.random.split(key)

    batch, num_channels, ndf, spatial = 2, 3, 8, 64   # DCGAN needs 64x64 input
    x = jax.random.normal(k_in, (batch, num_channels, spatial, spatial), jnp.float32)
    params = init_params(k_par, ndf, num_channels)

    out = jax.block_until_ready(discriminator_forward(params, x))
    ref = jax.block_until_ready(reference_forward(params, x))

    assert out.shape == (batch, 1, 1, 1), out.shape
    # bf16 MXU inputs with f32 accumulation -> compare against f32 reference
    # with a correspondingly loosened tolerance.
    assert jnp.allclose(out, ref, rtol=2e-2, atol=2e-2), (out, ref)
    print("KERNEL_OK")
</pallas_src>

<mosaic_0001>
module attributes {stable_mosaic.version = 11 : i64} {
  func.func @matmul_act_kernel(%arg0: i32, %arg1: memref<512x48xbf16, #tpu.memory_space<vmem>>, %arg2: memref<48x128xbf16, #tpu.memory_space<vmem>>, %arg3: memref<512x128xbf16, #tpu.memory_space<vmem>>) attributes {dimension_semantics = [#tpu.dimension_semantics<parallel>], iteration_bounds = array<i64: 4>, scalar_prefetch = 0 : i64, scratch_operands = 0 : i64, tpu.core_type = #tpu.core_type<tc>, window_params = [{transform_indices = @transform_0, window_bounds = array<i64: 512, 48>}, {pipeline_mode = #tpu.pipeline_mode<synchronous>, transform_indices = @transform_1, window_bounds = array<i64: 48, 128>}, {transform_indices = @transform_2, window_bounds = array<i64: 512, 128>}]} {
    %c0 = arith.constant 0 : index
    %c0_0 = arith.constant 0 : index
    %0 = vector.load %arg1[%c0, %c0_0] : memref<512x48xbf16, #tpu.memory_space<vmem>>, vector<512x48xbf16>
    %c0_1 = arith.constant 0 : index
    %c0_2 = arith.constant 0 : index
    %1 = vector.load %arg2[%c0_1, %c0_2] : memref<48x128xbf16, #tpu.memory_space<vmem>>, vector<48x128xbf16>
    %cst = arith.constant dense<0.000000e+00> : vector<512x128xf32>
    %2 = tpu.matmul %0, %1, %cst {dimension_numbers = #tpu.dot_dimension_numbers<[1], [0], [0], [1], [0, 0, 1, 1], [], []>} : vector<512x48xbf16>, vector<48x128xbf16>, vector<512x128xf32> -> vector<512x128xf32>
    %cst_3 = arith.constant 0.000000e+00 : f32
    %3 = vector.broadcast %cst_3 : f32 to vector<512x128xf32>
    %4 = arith.cmpf ogt, %2, %3 : vector<512x128xf32>
    %cst_4 = arith.constant 2.000000e-01 : f32
    %5 = vector.broadcast %cst_4 : f32 to vector<512x128xf32>
    %6 = arith.mulf %5, %2 : vector<512x128xf32>
    %7 = arith.select %4, %2, %6 : vector<512x128xi1>, vector<512x128xf32>
    %8 = arith.truncf %7 : vector<512x128xf32> to vector<512x128xbf16>
    %c0_5 = arith.constant 0 : index
    %c0_6 = arith.constant 0 : index
    %9 = vector.load %arg3[%c0_5, %c0_6] : memref<512x128xbf16, #tpu.memory_space<vmem>>, vector<512x128xbf16>
    tpu.vector_store %arg3[%c0_5, %c0_6], %8 {strides = array<i32>} : memref<512x128xbf16, #tpu.memory_space<vmem>>, vector<512x128xbf16>,
    return
  }
  func.func @transform_0(%arg0: i32) -> (i32, i32) {
    %c0_i32 = arith.constant 0 : i32
    %c0_i32_0 = arith.constant 0 : i32
    return %arg0, %c0_i32 : i32, i32
  }
  func.func @transform_1(%arg0: i32) -> (i32, i32) {
    %c0_i32 = arith.constant 0 : i32
    %c0_i32_0 = arith.constant 0 : i32
    %c0_i32_1 = arith.constant 0 : i32
    return %c0_i32, %c0_i32_0 : i32, i32
  }
  func.func @transform_2(%arg0: i32) -> (i32, i32) {
    %c0_i32 = arith.constant 0 : i32
    %c0_i32_0 = arith.constant 0 : i32
    return %arg0, %c0_i32 : i32, i32
  }
}

</mosaic_0001>

<llo_original>
// kernel: tpu_custom_call.1
$region0: #{tpu_custom_call.1}
  #allocation0 [shape = 'u32[]', space=smem, size = 0x4, offset = 0x4, fixed_abs, tag = 'smem constant byte address 0x4 - core index']
  #allocation1 [shape = 'u32[72,128]{1,0:T(1,128)}', space=vmem, size = 0x9000, scoped, tag = 'internal scratch']
  %s0 = inlined_call_operand.vmem [shape: bf16[2048,48], index: 0, kind: input, shape index: {}]
  %s1 = inlined_call_operand.vmem [shape: bf16[48,128], index: 1, kind: input, shape index: {}]
  %s2 = inlined_call_operand.hbm [shape: bf16[2048,128], index: 2, kind: output, shape index: {}]
  %s3 = sld [smem:[#allocation0]]
  $region41: #{tpu_custom_call.1} parent=0
    _
  %s5 = ssub.s32 1, %s3
  %s6 = scalar_select 0, %s5, %s3
  $region1: #{tpu_custom_call.1} parent=0
    #allocation2 [shape = 'u8[262144]{0}', space=vmem, size = 0x40000, scoped, tag = 'output window, operand 0']
    #allocation3 [shape = 's32[2]{0}', space=sflag, size = 0x8, scoped, tag = 'scoped memory for tpu_custom_call.1']
    %7 = vsyncpa [#allocation3], 0
    %s8 = scalar_lea.sflag [#allocation3], 1
    %9 = vsyncpa %s8, 0
    loop: start=0, step=1, limit=6
    $region2: #{tpu_custom_call.1} parent=1 // loop_pre_header
      _
    $region3: #{tpu_custom_call.1} parent=1 // loop_header
      %s11 = sphi 0, %s15
      %p12 = scmp.ge.s32.totalorder %s11, 6
      %s21 = sphi 0, %s23
      %s24 = sphi 0, %s21
      %s25 = sphi 0, %s24
      %s41 = sphi 0, %s25
      %s45 = sphi 0, %s45
      %s47 = sphi 0, %s45
      %s48 = sphi 0, %s47
      %s62 = sphi 0, %s48
      %s68 = sphi 0, %s70
      %s71 = sphi 0, %s68
      %s72 = sphi 0, %s71
      %s88 = sphi 0, %s72
    $region4: #{tpu_custom_call.1} parent=1 // loop_header_branch
      %14 = sbr.rel (%p12) target = $region8
    $region5: #{tpu_custom_call.1} parent=1 // loop_body
      %s16 = ssub.s32 %s11, 1
      %s17 = ssub.s32 %s11, 2
      %s18 = sadd.s32 %s11, 1
      %s19 = ssub.s32 %s11, %s18
      %p20 = scmp.eq.s32.totalorder %s19, 0
      %s22 = sadd.s32 %s21, 1
      %s23 = scalar_select %p20, %s21, %s22
      %p26 = pneg %p20
      %p27 = scmp.eq.s32.totalorder %s11, 3
      %p28 = por %p26, %p27
      %p29 = scmp.ne.s32.totalorder %s21, %s24
      %p30 = scmp.eq.s32.totalorder %s11, 0
      %p31 = por %p29, %p30
      %p32 = scmp.ne.s32.totalorder %s21, %s24
      %p33 = scmp.eq.s32.totalorder %s16, 3
      %p34 = por %p32, %p33
      %p35 = scmp.ne.s32.totalorder %s24, %s25
      %p36 = scmp.eq.s32.totalorder %s16, 0
      %p37 = por %p35, %p36
      %p38 = scmp.ne.s32.totalorder %s24, %s25
      %p39 = scmp.eq.s32.totalorder %s17, 3
      %p40 = por %p38, %p39
      %p42 = scmp.ne.s32.totalorder %s25, %s41
      %p43 = scmp.eq.s32.totalorder %s17, 0
      %p44 = por %p42, %p43
      %s46 = sadd.s32 %s45, 1
      %p49 = scmp.eq.s32.totalorder %s11, 3
      %p50 = scmp.ne.s32.totalorder %s45, %s47
      %p51 = scmp.eq.s32.totalorder %s11, 0
      %p52 = por %p50, %p51
      %p53 = scmp.ne.s32.totalorder %s45, %s47
      %p54 = scmp.eq.s32.totalorder %s16, 3
      %p55 = por %p53, %p54
      %p56 = scmp.ne.s32.totalorder %s47, %s48
      %p57 = scmp.eq.s32.totalorder %s16, 0
      %p58 = por %p56, %p57
      %p59 = scmp.ne.s32.totalorder %s47, %s48
      %p60 = scmp.eq.s32.totalorder %s17, 3
      %p61 = por %p59, %p60
      %p63 = scmp.ne.s32.totalorder %s48, %s62
      %p64 = scmp.eq.s32.totalorder %s17, 0
      %p65 = por %p63, %p64
      %s66 = ssub.s32 %s11, %s18
      %p67 = scmp.eq.s32.totalorder %s66, 0
      %s69 = sadd.s32 %s68, 1
      %s70 = scalar_select %p67, %s68, %s69
      %p73 = pneg %p67
      %p74 = scmp.eq.s32.totalorder %s11, 3
      %p75 = por %p73, %p74
      %p76 = scmp.ne.s32.totalorder %s68, %s71
      %p77 = scmp.eq.s32.totalorder %s11, 0
      %p78 = por %p76, %p77
      %p79 = scmp.ne.s32.totalorder %s68, %s71
      %p80 = scmp.eq.s32.totalorder %s16, 3
      %p81 = por %p79, %p80
      %p82 = scmp.ne.s32.totalorder %s71, %s72
      %p83 = scmp.eq.s32.totalorder %s16, 0
      %p84 = por %p82, %p83
      %p85 = scmp.ne.s32.totalorder %s71, %s72
      %p86 = scmp.eq.s32.totalorder %s17, 3
      %p87 = por %p85, %p86
      %p89 = scmp.ne.s32.totalorder %s72, %s88
      %p90 = scmp.eq.s32.totalorder %s17, 0
      %p91 = por %p89, %p90
      %p92 = scmp.le.s32.totalorder 1, %s11
      %p93 = scmp.lt.s32.totalorder %s11, 5
      %p94 = pnand %p92, %p93
      %p95 = pneg %p94
      // Predicated region
      $region9: #{tpu_custom_call.1} parent=5 // pred_check
        _
      $region10: #{tpu_custom_call.1} parent=5 // pred_check_branch
        %97 = sbr.rel (%p94) target = $region12
      $region11: #{tpu_custom_call.1} parent=5 // pred_region
        %s98 = ssub.s32 %s11, 1
        // Predicated region
        $region13: #{tpu_custom_call.1} parent=11 // pred_check
          %p99 = pneg %p58
        $region14: #{tpu_custom_call.1} parent=11 // pred_check_branch
          %101 = sbr.rel (%p99) target = $region16
        $region15: #{tpu_custom_call.1} parent=11 // pred_region
          _
        $region16: #{tpu_custom_call.1} parent=11 // pred_fallthru
          _
      $region12: #{tpu_custom_call.1} parent=5 // pred_fallthru
        _
      %p102 = scmp.lt.s32.totalorder %s11, 4
      // Predicated region
      $region17: #{tpu_custom_call.1} parent=5 // pred_check
        %p103 = pneg %p102
      $region18: #{tpu_custom_call.1} parent=5 // pred_check_branch
        %105 = sbr.rel (%p103) target = $region20
      $region19: #{tpu_custom_call.1} parent=5 // pred_region
        // Predicated region
        $region21: #{tpu_custom_call.1} parent=19 // pred_check
          %p106 = pneg %p31
        $region22: #{tpu_custom_call.1} parent=19 // pred_check_branch
          %108 = sbr.rel (%p106) target = $region24
        $region23: #{tpu_custom_call.1} parent=19 // pred_region
          %s109 = smul.u32 64, %s11
          %p110 = scmp.lt.s32.totalorder %s109, 255
          %s111 = scalar_select %p110, %s109, 255
          %s112 = smul.addr %s111, 4
          %s113 = scalar_lea.vmem %s0, %s112
          %s114 = smul.u32 64, %s11
        $region24: #{tpu_custom_call.1} parent=19 // pred_fallthru
          _
      $region20: #{tpu_custom_call.1} parent=5 // pred_fallthru
        _
      %p115 = scmp.le.s32.totalorder 1, %s11
      %p116 = scmp.lt.s32.totalorder %s11, 5
      %p117 = pnand %p115, %p116
      %p118 = pneg %p117
      // Predicated region
      $region25: #{tpu_custom_call.1} parent=5 // pred_check
        _
      $region26: #{tpu_custom_call.1} parent=5 // pred_check_branch
        %120 = sbr.rel (%p117) target = $region28
      $region27: #{tpu_custom_call.1} parent=5 // pred_region
        %s121 = ssub.s32 %s11, 1
        %s122 = smul.u32 64, %s16
        %p123 = scmp.lt.s32.totalorder %s122, 255
        %s124 = scalar_select %p123, %s122, 255
        %s125 = smul.addr %s124, 4
        %s126 = scalar_lea.vmem %s0, %s125
        %p127 = pneg %p37
        %p128 = pneg %p34
        %p129 = pneg %p58
        %p130 = pneg %p55
        %p131 = pneg %p84
        %p132 = pneg %p81
        %s133 = sand.u32 %s71, 1
        %s134 = scalar_lea.sflag [#allocation3], %s133
        %s135 = sand.u32 %s71, 1
        %s136 = smul.addr %s135, 256
        %s137 = scalar_lea.vmem [#allocation2], %s136
        %s138 = smul.u32 64, %s16
        %p139 = scmp.lt.s32.totalorder %s138, 255
        %s140 = scalar_select %p139, %s138, 255
        %s141 = smul.addr %s140, 4
        %s142 = scalar_lea.vmem %s0, %s141
        %s143 = smul.u32 64, %s16
        %s144 = smul.u32 64, %s16
        %v146 = vld [vmem:[%s142] sm:$0xf]
        %v147 = vld [vmem:[%s142 + $0x4] sm:$0xf]
        %v148 = vld [vmem:[%s142 + $0x8] sm:$0xf]
        %v149 = vld [vmem:[%s142 + $0xc] sm:$0xf]
        %v150 = vld [vmem:[%s142 + $0x10] sm:$0xf]
        %v151 = vld [vmem:[%s142 + $0x14] sm:$0xf]
        %v152 = vld [vmem:[%s142 + $0x18] sm:$0xf]
        %v153 = vld [vmem:[%s142 + $0x1c] sm:$0xf]
        %v154 = vld [vmem:[%s142 + $0x20] sm:$0xf]
        %v155 = vld [vmem:[%s142 + $0x24] sm:$0xf]
        %v156 = vld [vmem:[%s142 + $0x28] sm:$0xf]
        %v157 = vld [vmem:[%s142 + $0x2c] sm:$0xf]
        %v158 = vld [vmem:[%s142 + $0x30] sm:$0xf]
        %v159 = vld [vmem:[%s142 + $0x34] sm:$0xf]
        %v160 = vld [vmem:[%s142 + $0x38] sm:$0xf]
        %v161 = vld [vmem:[%s142 + $0x3c] sm:$0xf]
        %v162 = vld [vmem:[%s142 + $0x40] sm:$0xf]
        %v163 = vld [vmem:[%s142 + $0x44] sm:$0xf]
        %v164 = vld [vmem:[%s142 + $0x48] sm:$0xf]
        %v165 = vld [vmem:[%s142 + $0x4c] sm:$0xf]
        %v166 = vld [vmem:[%s142 + $0x50] sm:$0xf]
        %v167 = vld [vmem:[%s142 + $0x54] sm:$0xf]
        %v168 = vld [vmem:[%s142 + $0x58] sm:$0xf]
        %v169 = vld [vmem:[%s142 + $0x5c] sm:$0xf]
        %v170 = vld [vmem:[%s142 + $0x60] sm:$0xf]
        %v171 = vld [vmem:[%s142 + $0x64] sm:$0xf]
        %v172 = vld [vmem:[%s142 + $0x68] sm:$0xf]
        %v173 = vld [vmem:[%s142 + $0x6c] sm:$0xf]
        %v174 = vld [vmem:[%s142 + $0x70] sm:$0xf]
        %v175 = vld [vmem:[%s142 + $0x74] sm:$0xf]
        %v176 = vld [vmem:[%s142 + $0x78] sm:$0xf]
        %v177 = vld [vmem:[%s142 + $0x7c] sm:$0xf]
        %v178 = vld [vmem:[%s142 + $0x80] sm:$0xf]
        %v179 = vld [vmem:[%s142 + $0x84] sm:$0xf]
        %v180 = vld [vmem:[%s142 + $0x88] sm:$0xf]
        %v181 = vld [vmem:[%s142 + $0x8c] sm:$0xf]
        %v182 = vld [vmem:[%s142 + $0x90] sm:$0xf]
        %v183 = vld [vmem:[%s142 + $0x94] sm:$0xf]
        %v184 = vld [vmem:[%s142 + $0x98] sm:$0xf]
        %v185 = vld [vmem:[%s142 + $0x9c] sm:$0xf]
        %v186 = vld [vmem:[%s142 + $0xa0] sm:$0xf]
        %v187 = vld [vmem:[%s142 + $0xa4] sm:$0xf]
        %v188 = vld [vmem:[%s142 + $0xa8] sm:$0xf]
        %v189 = vld [vmem:[%s142 + $0xac] sm:$0xf]
        %v190 = vld [vmem:[%s142 + $0xb0] sm:$0xf]
        %v191 = vld [vmem:[%s142 + $0xb4] sm:$0xf]
        %v192 = vld [vmem:[%s142 + $0xb8] sm:$0xf]
        %v193 = vld [vmem:[%s142 + $0xbc] sm:$0xf]
        %v194 = vld [vmem:[%s142 + $0xc0] sm:$0xf]
        %v195 = vld [vmem:[%s142 + $0xc4] sm:$0xf]
        %v196 = vld [vmem:[%s142 + $0xc8] sm:$0xf]
        %v197 = vld [vmem:[%s142 + $0xcc] sm:$0xf]
        %v198 = vld [vmem:[%s142 + $0xd0] sm:$0xf]
        %v199 = vld [vmem:[%s142 + $0xd4] sm:$0xf]
        %v200 = vld [vmem:[%s142 + $0xd8] sm:$0xf]
        %v201 = vld [vmem:[%s142 + $0xdc] sm:$0xf]
        %v202 = vld [vmem:[%s142 + $0xe0] sm:$0xf]
        %v203 = vld [vmem:[%s142 + $0xe4] sm:$0xf]
        %v204 = vld [vmem:[%s142 + $0xe8] sm:$0xf]
        %v205 = vld [vmem:[%s142 + $0xec] sm:$0xf]
        %v206 = vld [vmem:[%s142 + $0xf0] sm:$0xf]
        %v207 = vld [vmem:[%s142 + $0xf4] sm:$0xf]
        %v208 = vld [vmem:[%s142 + $0xf8] sm:$0xf]
        %v209 = vld [vmem:[%s142 + $0xfc] sm:$0xf]
        %v210 = vld [vmem:[%s1] sm:$0xf]
        %v211 = vld [vmem:[%s1 + $0x4] sm:$0xf]
        %v212 = vld [vmem:[%s1 + $0x8] sm:$0xf]
        %v213 = vld [vmem:[%s1 + $0xc] sm:$0xf]
        %v214 = vld [vmem:[%s1 + $0x10] sm:$0xf]
        %v215 = vld [vmem:[%s1 + $0x14] sm:$0xf]
        %v280 = vunpack.c.l.b16 %v146
        %v281 = vunpack.c.l.b16 %v147
        %v282 = vunpack.c.l.b16 %v148
        %v283 = vunpack.c.l.b16 %v149
        %v284 = vunpack.c.l.b16 %v150
        %v285 = vunpack.c.l.b16 %v151
        %v286 = vunpack.c.l.b16 %v152
        %v287 = vunpack.c.l.b16 %v153
        %v288 = vunpack.c.l.b16 %v154
        %v289 = vunpack.c.l.b16 %v155
        %v290 = vunpack.c.l.b16 %v156
        %v291 = vunpack.c.l.b16 %v157
        %v292 = vunpack.c.l.b16 %v158
        %v293 = vunpack.c.l.b16 %v159
        %v294 = vunpack.c.l.b16 %v160
        %v295 = vunpack.c.l.b16 %v161
        %v296 = vunpack.c.l.b16 %v162
        %v297 = vunpack.c.l.b16 %v163
        %v298 = vunpack.c.l.b16 %v164
        %v299 = vunpack.c.l.b16 %v165
        %v300 = vunpack.c.l.b16 %v166
        %v301 = vunpack.c.l.b16 %v167
        %v302 = vunpack.c.l.b16 %v168
        %v303 = vunpack.c.l.b16 %v169
        %v304 = vunpack.c.l.b16 %v170
        %v305 = vunpack.c.l.b16 %v171
        %v306 = vunpack.c.l.b16 %v172
        %v307 = vunpack.c.l.b16 %v173
        %v308 = vunpack.c.l.b16 %v174
        %v309 = vunpack.c.l.b16 %v175
        %v310 = vunpack.c.l.b16 %v176
        %v311 = vunpack.c.l.b16 %v177
        %v312 = vunpack.c.l.b16 %v178
        %v313 = vunpack.c.l.b16 %v179
        %v314 = vunpack.c.l.b16 %v180
        %v315 = vunpack.c.l.b16 %v181
        %v316 = vunpack.c.l.b16 %v182
        %v317 = vunpack.c.l.b16 %v183
        %v318 = vunpack.c.l.b16 %v184
        %v319 = vunpack.c.l.b16 %v185
        %v320 = vunpack.c.l.b16 %v186
        %v321 = vunpack.c.l.b16 %v187
        %v322 = vunpack.c.l.b16 %v188
        %v323 = vunpack.c.l.b16 %v189
        %v324 = vunpack.c.l.b16 %v190
        %v325 = vunpack.c.l.b16 %v191
        %v326 = vunpack.c.l.b16 %v192
        %v327 = vunpack.c.l.b16 %v193
        %v328 = vunpack.c.l.b16 %v194
        %v329 = vunpack.c.l.b16 %v195
        %v330 = vunpack.c.l.b16 %v196
        %v331 = vunpack.c.l.b16 %v197
        %v332 = vunpack.c.l.b16 %v198
        %v333 = vunpack.c.l.b16 %v199
        %v334 = vunpack.c.l.b16 %v200
        %v335 = vunpack.c.l.b16 %v201
        %v336 = vunpack.c.l.b16 %v202
        %v337 = vunpack.c.l.b16 %v203
        %v338 = vunpack.c.l.b16 %v204
        %v339 = vunpack.c.l.b16 %v205
        %v340 = vunpack.c.l.b16 %v206
        %v341 = vunpack.c.l.b16 %v207
        %v342 = vunpack.c.l.b16 %v208
        %v343 = vunpack.c.l.b16 %v209
        %v344 = vpack.c.b16 %v281, %v280
        %v345 = vpack.c.b16 %v283, %v282
        %v346 = vpack.c.b16 %v285, %v284
        %v347 = vpack.c.b16 %v287, %v286
        %v348 = vpack.c.b16 %v289, %v288
        %v349 = vpack.c.b16 %v291, %v290
        %v350 = vpack.c.b16 %v293, %v292
        %v351 = vpack.c.b16 %v295, %v294
        %v352 = vpack.c.b16 %v297, %v296
        %v353 = vpack.c.b16 %v299, %v298
        %v354 = vpack.c.b16 %v301, %v300
        %v355 = vpack.c.b16 %v303, %v302
        %v356 = vpack.c.b16 %v305, %v304
        %v357 = vpack.c.b16 %v307, %v306
        %v358 = vpack.c.b16 %v309, %v308
        %v359 = vpack.c.b16 %v311, %v310
        %v360 = vpack.c.b16 %v313, %v312
        %v361 = vpack.c.b16 %v315, %v314
        %v362 = vpack.c.b16 %v317, %v316
        %v363 = vpack.c.b16 %v319, %v318
        %v364 = vpack.c.b16 %v321, %v320
        %v365 = vpack.c.b16 %v323, %v322
        %v366 = vpack.c.b16 %v325, %v324
        %v367 = vpack.c.b16 %v327, %v326
        %v368 = vpack.c.b16 %v329, %v328
        %v369 = vpack.c.b16 %v331, %v330
        %v370 = vpack.c.b16 %v333, %v332
        %v371 = vpack.c.b16 %v335, %v334
        %v372 = vpack.c.b16 %v337, %v336
        %v373 = vpack.c.b16 %v339, %v338
        %v374 = vpack.c.b16 %v341, %v340
        %v375 = vpack.c.b16 %v343, %v342
        %v382 = vunpack.c.l.b16 %v210
        %v383 = vunpack.c.l.b16 %v211
        %v384 = vunpack.c.l.b16 %v212
        %v385 = vunpack.c.l.b16 %v213
        %v386 = vunpack.c.l.b16 %v214
        %v387 = vunpack.c.l.b16 %v215
        %v388 = vpack.c.b16 %v383, %v382
        %v389 = vpack.c.b16 %v385, %v384
        %v390 = vpack.c.b16 %v387, %v386
        %vm394 = vcmask 392192
        %v396 = vsel %vm394, %v344, 0
        %v399 = vsel %vm394, %v345, 0
        %v402 = vsel %vm394, %v346, 0
        %v405 = vsel %vm394, %v347, 0
        %v408 = vsel %vm394, %v348, 0
        %v411 = vsel %vm394, %v349, 0
        %v414 = vsel %vm394, %v350, 0
        %v417 = vsel %vm394, %v351, 0
        %v420 = vsel %vm394, %v352, 0
        %v423 = vsel %vm394, %v353, 0
        %v426 = vsel %vm394, %v354, 0
        %v429 = vsel %vm394, %v355, 0
        %v432 = vsel %vm394, %v356, 0
        %v435 = vsel %vm394, %v357, 0
        %v438 = vsel %vm394, %v358, 0
        %v441 = vsel %vm394, %v359, 0
        %v444 = vsel %vm394, %v360, 0
        %v447 = vsel %vm394, %v361, 0
        %v450 = vsel %vm394, %v362, 0
        %v453 = vsel %vm394, %v363, 0
        %v456 = vsel %vm394, %v364, 0
        %v459 = vsel %vm394, %v365, 0
        %v462 = vsel %vm394, %v366, 0
        %v465 = vsel %vm394, %v367, 0
        %v468 = vsel %vm394, %v368, 0
        %v471 = vsel %vm394, %v369, 0
        %v474 = vsel %vm394, %v370, 0
        %v477 = vsel %vm394, %v371, 0
        %v480 = vsel %vm394, %v372, 0
        %v483 = vsel %vm394, %v373, 0
        %v486 = vsel %vm394, %v374, 0
        %v489 = vsel %vm394, %v375, 0
        %491 = vmatpush.bf16.msra.mxu0 0
        %492 = vmatpush.bf16.msra.mxu0 0
        %493 = vmatpush.bf16.msra.mxu0 0
        %494 = vmatpush.bf16.msra.mxu0 0
        %495 = vmatpush.bf16.msra.mxu0 0
        %496 = vmatpush.bf16.msra.mxu0 %v390
        %497 = vmatpush.bf16.msra.mxu0 %v389
        %498 = vmatpush.bf16.msra.mxu0 %v388
        %499 = vmatmul.bf16.gmra.mxu0 %v396
        %v500 = vpop.f32.mrf.mxu0
        %v501 = vadd.f32 0.0, %v500
        %v502 = vpop.f32.mrf.mxu0
        %v503 = vadd.f32 0.0, %v502
        %504 = vmatmul.bf16.gmra.mxu0 %v399
        %v505 = vpop.f32.mrf.mxu0
        %v506 = vadd.f32 0.0, %v505
        %v507 = vpop.f32.mrf.mxu0
        %v508 = vadd.f32 0.0, %v507
        %509 = vmatmul.bf16.gmra.mxu0 %v402
        %v510 = vpop.f32.mrf.mxu0
        %v511 = vadd.f32 0.0, %v510
        %v512 = vpop.f32.mrf.mxu0
        %v513 = vadd.f32 0.0, %v512
        %514 = vmatmul.bf16.gmra.mxu0 %v405
        %v515 = vpop.f32.mrf.mxu0
        %v516 = vadd.f32 0.0, %v515
        %v517 = vpop.f32.mrf.mxu0
        %v518 = vadd.f32 0.0, %v517
        %519 = vmatmul.bf16.gmra.mxu0 %v408
        %v520 = vpop.f32.mrf.mxu0
        %v521 = vadd.f32 0.0, %v520
        %v522 = vpop.f32.mrf.mxu0
        %v523 = vadd.f32 0.0, %v522
        %524 = vmatmul.bf16.gmra.mxu0 %v411
        %v525 = vpop.f32.mrf.mxu0
        %v526 = vadd.f32 0.0, %v525
        %v527 = vpop.f32.mrf.mxu0
        %v528 = vadd.f32 0.0, %v527
        %529 = vmatmul.bf16.gmra.mxu0 %v414
        %v530 = vpop.f32.mrf.mxu0
        %v531 = vadd.f32 0.0, %v530
        %v532 = vpop.f32.mrf.mxu0
        %v533 = vadd.f32 0.0, %v532
        %534 = vmatmul.bf16.gmra.mxu0 %v417
        %v535 = vpop.f32.mrf.mxu0
        %v536 = vadd.f32 0.0, %v535
        %v537 = vpop.f32.mrf.mxu0
        %v538 = vadd.f32 0.0, %v537
        %539 = vmatmul.bf16.gmra.mxu0 %v420
        %v540 = vpop.f32.mrf.mxu0
        %v541 = vadd.f32 0.0, %v540
        %v542 = vpop.f32.mrf.mxu0
        %v543 = vadd.f32 0.0, %v542
        %544 = vmatmul.bf16.gmra.mxu0 %v423
        %v545 = vpop.f32.mrf.mxu0
        %v546 = vadd.f32 0.0, %v545
        %v547 = vpop.f32.mrf.mxu0
        %v548 = vadd.f32 0.0, %v547
        %549 = vmatmul.bf16.gmra.mxu0 %v426
        %v550 = vpop.f32.mrf.mxu0
        %v551 = vadd.f32 0.0, %v550
        %v552 = vpop.f32.mrf.mxu0
        %v553 = vadd.f32 0.0, %v552
        %554 = vmatmul.bf16.gmra.mxu0 %v429
        %v555 = vpop.f32.mrf.mxu0
        %v556 = vadd.f32 0.0, %v555
        %v557 = vpop.f32.mrf.mxu0
        %v558 = vadd.f32 0.0, %v557
        %559 = vmatmul.bf16.gmra.mxu0 %v432
        %v560 = vpop.f32.mrf.mxu0
        %v561 = vadd.f32 0.0, %v560
        %v562 = vpop.f32.mrf.mxu0
        %v563 = vadd.f32 0.0, %v562
        %564 = vmatmul.bf16.gmra.mxu0 %v435
        %v565 = vpop.f32.mrf.mxu0
        %v566 = vadd.f32 0.0, %v565
        %v567 = vpop.f32.mrf.mxu0
        %v568 = vadd.f32 0.0, %v567
        %569 = vmatmul.bf16.gmra.mxu0 %v438
        %v570 = vpop.f32.mrf.mxu0
        %v571 = vadd.f32 0.0, %v570
        %v572 = vpop.f32.mrf.mxu0
        %v573 = vadd.f32 0.0, %v572
        %574 = vmatmul.bf16.gmra.mxu0 %v441
        %v575 = vpop.f32.mrf.mxu0
        %v576 = vadd.f32 0.0, %v575
        %v577 = vpop.f32.mrf.mxu0
        %v578 = vadd.f32 0.0, %v577
        %579 = vmatmul.bf16.gmra.mxu0 %v444
        %v580 = vpop.f32.mrf.mxu0
        %v581 = vadd.f32 0.0, %v580
        %v582 = vpop.f32.mrf.mxu0
        %v583 = vadd.f32 0.0, %v582
        %584 = vmatmul.bf16.gmra.mxu0 %v447
        %v585 = vpop.f32.mrf.mxu0
        %v586 = vadd.f32 0.0, %v585
        %v587 = vpop.f32.mrf.mxu0
        %v588 = vadd.f32 0.0, %v587
        %589 = vmatmul.bf16.gmra.mxu0 %v450
        %v590 = vpop.f32.mrf.mxu0
        %v591 = vadd.f32 0.0, %v590
        %v592 = vpop.f32.mrf.mxu0
        %v593 = vadd.f32 0.0, %v592
        %594 = vmatmul.bf16.gmra.mxu0 %v453
        %v595 = vpop.f32.mrf.mxu0
        %v596 = vadd.f32 0.0, %v595
        %v597 = vpop.f32.mrf.mxu0
        %v598 = vadd.f32 0.0, %v597
        %599 = vmatmul.bf16.gmra.mxu0 %v456
        %v600 = vpop.f32.mrf.mxu0
        %v601 = vadd.f32 0.0, %v600
        %v602 = vpop.f32.mrf.mxu0
        %v603 = vadd.f32 0.0, %v602
        %604 = vmatmul.bf16.gmra.mxu0 %v459
        %v605 = vpop.f32.mrf.mxu0
        %v606 = vadd.f32 0.0, %v605
        %v607 = vpop.f32.mrf.mxu0
        %v608 = vadd.f32 0.0, %v607
        %609 = vmatmul.bf16.gmra.mxu0 %v462
        %v610 = vpop.f32.mrf.mxu0
        %v611 = vadd.f32 0.0, %v610
        %v612 = vpop.f32.mrf.mxu0
        %v613 = vadd.f32 0.0, %v612
        %614 = vmatmul.bf16.gmra.mxu0 %v465
        %v615 = vpop.f32.mrf.mxu0
        %v616 = vadd.f32 0.0, %v615
        %v617 = vpop.f32.mrf.mxu0
        %v618 = vadd.f32 0.0, %v617
        %619 = vmatmul.bf16.gmra.mxu0 %v468
        %v620 = vpop.f32.mrf.mxu0
        %v621 = vadd.f32 0.0, %v620
        %v622 = vpop.f32.mrf.mxu0
        %v623 = vadd.f32 0.0, %v622
        %624 = vmatmul.bf16.gmra.mxu0 %v471
        %v625 = vpop.f32.mrf.mxu0
        %v626 = vadd.f32 0.0, %v625
        %v627 = vpop.f32.mrf.mxu0
        %v628 = vadd.f32 0.0, %v627
        %629 = vmatmul.bf16.gmra.mxu0 %v474
        %v630 = vpop.f32.mrf.mxu0
        %v631 = vadd.f32 0.0, %v630
        %v632 = vpop.f32.mrf.mxu0
        %v633 = vadd.f32 0.0, %v632
        %634 = vmatmul.bf16.gmra.mxu0 %v477
        %v635 = vpop.f32.mrf.mxu0
        %v636 = vadd.f32 0.0, %v635
        %v637 = vpop.f32.mrf.mxu0
        %v638 = vadd.f32 0.0, %v637
        %639 = vmatmul.bf16.gmra.mxu0 %v480
        %v640 = vpop.f32.mrf.mxu0
        %v641 = vadd.f32 0.0, %v640
        %v642 = vpop.f32.mrf.mxu0
        %v643 = vadd.f32 0.0, %v642
        %644 = vmatmul.bf16.gmra.mxu0 %v483
        %v645 = vpop.f32.mrf.mxu0
        %v646 = vadd.f32 0.0, %v645
        %v647 = vpop.f32.mrf.mxu0
        %v648 = vadd.f32 0.0, %v647
        %649 = vmatmul.bf16.gmra.mxu0 %v486
        %v650 = vpop.f32.mrf.mxu0
        %v651 = vadd.f32 0.0, %v650
        %v652 = vpop.f32.mrf.mxu0
        %v653 = vadd.f32 0.0, %v652
        %654 = vmatmul.bf16.gmra.mxu0 %v489
        %v655 = vpop.f32.mrf.mxu0
        %v656 = vadd.f32 0.0, %v655
        %v657 = vpop.f32.mrf.mxu0
        %v658 = vadd.f32 0.0, %v657
        %659 = vdwg.mxu0
        %vm660 = vcmp.gt.f32.partialorder %v501, 0.0
        %vm661 = vcmp.gt.f32.partialorder %v503, 0.0
        %vm662 = vcmp.gt.f32.partialorder %v506, 0.0
        %vm663 = vcmp.gt.f32.partialorder %v508, 0.0
        %vm664 = vcmp.gt.f32.partialorder %v511, 0.0
        %vm665 = vcmp.gt.f32.partialorder %v513, 0.0
        %vm666 = vcmp.gt.f32.partialorder %v516, 0.0
        %vm667 = vcmp.gt.f32.partialorder %v518, 0.0
        %vm668 = vcmp.gt.f32.partialorder %v521, 0.0
        %vm669 = vcmp.gt.f32.partialorder %v523, 0.0
        %vm670 = vcmp.gt.f32.partialorder %v526, 0.0
        %vm671 = vcmp.gt.f32.partialorder %v528, 0.0
        %vm672 = vcmp.gt.f32.partialorder %v531, 0.0
        %vm673 = vcmp.gt.f32.partialorder %v533, 0.0
        %vm674 = vcmp.gt.f32.partialorder %v536, 0.0
        %vm675 = vcmp.gt.f32.partialorder %v538, 0.0
        %vm676 = vcmp.gt.f32.partialorder %v541, 0.0
        %vm677 = vcmp.gt.f32.partialorder %v543, 0.0
        %vm678 = vcmp.gt.f32.partialorder %v546, 0.0
        %vm679 = vcmp.gt.f32.partialorder %v548, 0.0
        %vm680 = vcmp.gt.f32.partialorder %v551, 0.0
        %vm681 = vcmp.gt.f32.partialorder %v553, 0.0
        %vm682 = vcmp.gt.f32.partialorder %v556, 0.0
        %vm683 = vcmp.gt.f32.partialorder %v558, 0.0
        %vm684 = vcmp.gt.f32.partialorder %v561, 0.0
        %vm685 = vcmp.gt.f32.partialorder %v563, 0.0
        %vm686 = vcmp.gt.f32.partialorder %v566, 0.0
        %vm687 = vcmp.gt.f32.partialorder %v568, 0.0
        %vm688 = vcmp.gt.f32.partialorder %v571, 0.0
        %vm689 = vcmp.gt.f32.partialorder %v573, 0.0
        %vm690 = vcmp.gt.f32.partialorder %v576, 0.0
        %vm691 = vcmp.gt.f32.partialorder %v578, 0.0
        %vm692 = vcmp.gt.f32.partialorder %v581, 0.0
        %vm693 = vcmp.gt.f32.partialorder %v583, 0.0
        %vm694 = vcmp.gt.f32.partialorder %v586, 0.0
        %vm695 = vcmp.gt.f32.partialorder %v588, 0.0
        %vm696 = vcmp.gt.f32.partialorder %v591, 0.0
        %vm697 = vcmp.gt.f32.partialorder %v593, 0.0
        %vm698 = vcmp.gt.f32.partialorder %v596, 0.0
        %vm699 = vcmp.gt.f32.partialorder %v598, 0.0
        %vm700 = vcmp.gt.f32.partialorder %v601, 0.0
        %vm701 = vcmp.gt.f32.partialorder %v603, 0.0
        %vm702 = vcmp.gt.f32.partialorder %v606, 0.0
        %vm703 = vcmp.gt.f32.partialorder %v608, 0.0
        %vm704 = vcmp.gt.f32.partialorder %v611, 0.0
        %vm705 = vcmp.gt.f32.partialorder %v613, 0.0
        %vm706 = vcmp.gt.f32.partialorder %v616, 0.0
        %vm707 = vcmp.gt.f32.partialorder %v618, 0.0
        %vm708 = vcmp.gt.f32.partialorder %v621, 0.0
        %vm709 = vcmp.gt.f32.partialorder %v623, 0.0
        %vm710 = vcmp.gt.f32.partialorder %v626, 0.0
        %vm711 = vcmp.gt.f32.partialorder %v628, 0.0
        %vm712 = vcmp.gt.f32.partialorder %v631, 0.0
        %vm713 = vcmp.gt.f32.partialorder %v633, 0.0
        %vm714 = vcmp.gt.f32.partialorder %v636, 0.0
        %vm715 = vcmp.gt.f32.partialorder %v638, 0.0
        %vm716 = vcmp.gt.f32.partialorder %v641, 0.0
        %vm717 = vcmp.gt.f32.partialorder %v643, 0.0
        %vm718 = vcmp.gt.f32.partialorder %v646, 0.0
        %vm719 = vcmp.gt.f32.partialorder %v648, 0.0
        %vm720 = vcmp.gt.f32.partialorder %v651, 0.0
        %vm721 = vcmp.gt.f32.partialorder %v653, 0.0
        %vm722 = vcmp.gt.f32.partialorder %v656, 0.0
        %vm723 = vcmp.gt.f32.partialorder %v658, 0.0
        %v724 = vmul.f32 %v501, 0.2
        %v725 = vmul.f32 %v503, 0.2
        %v726 = vmul.f32 %v506, 0.2
        %v727 = vmul.f32 %v508, 0.2
        %v728 = vmul.f32 %v511, 0.2
        %v729 = vmul.f32 %v513, 0.2
        %v730 = vmul.f32 %v516, 0.2
        %v731 = vmul.f32 %v518, 0.2
        %v732 = vmul.f32 %v521, 0.2
        %v733 = vmul.f32 %v523, 0.2
        %v734 = vmul.f32 %v526, 0.2
        %v735 = vmul.f32 %v528, 0.2
        %v736 = vmul.f32 %v531, 0.2
        %v737 = vmul.f32 %v533, 0.2
        %v738 = vmul.f32 %v536, 0.2
        %v739 = vmul.f32 %v538, 0.2
        %v740 = vmul.f32 %v541, 0.2
        %v741 = vmul.f32 %v543, 0.2
        %v742 = vmul.f32 %v546, 0.2
        %v743 = vmul.f32 %v548, 0.2
        %v744 = vmul.f32 %v551, 0.2
        %v745 = vmul.f32 %v553, 0.2
        %v746 = vmul.f32 %v556, 0.2
        %v747 = vmul.f32 %v558, 0.2
        %v748 = vmul.f32 %v561, 0.2
        %v749 = vmul.f32 %v563, 0.2
        %v750 = vmul.f32 %v566, 0.2
        %v751 = vmul.f32 %v568, 0.2
        %v752 = vmul.f32 %v571, 0.2
        %v753 = vmul.f32 %v573, 0.2
        %v754 = vmul.f32 %v576, 0.2
        %v755 = vmul.f32 %v578, 0.2
        %v756 = vmul.f32 %v581, 0.2
        %v757 = vmul.f32 %v583, 0.2
        %v758 = vmul.f32 %v586, 0.2
        %v759 = vmul.f32 %v588, 0.2
        %v760 = vmul.f32 %v591, 0.2
        %v761 = vmul.f32 %v593, 0.2
        %v762 = vmul.f32 %v596, 0.2
        %v763 = vmul.f32 %v598, 0.2
        %v764 = vmul.f32 %v601, 0.2
        %v765 = vmul.f32 %v603, 0.2
        %v766 = vmul.f32 %v606, 0.2
        %v767 = vmul.f32 %v608, 0.2
        %v768 = vmul.f32 %v611, 0.2
        %v769 = vmul.f32 %v613, 0.2
        %v770 = vmul.f32 %v616, 0.2
        %v771 = vmul.f32 %v618, 0.2
        %v772 = vmul.f32 %v621, 0.2
        %v773 = vmul.f32 %v623, 0.2
        %v774 = vmul.f32 %v626, 0.2
        %v775 = vmul.f32 %v628, 0.2
        %v776 = vmul.f32 %v631, 0.2
        %v777 = vmul.f32 %v633, 0.2
        %v778 = vmul.f32 %v636, 0.2
        %v779 = vmul.f32 %v638, 0.2
        %v780 = vmul.f32 %v641, 0.2
        %v781 = vmul.f32 %v643, 0.2
        %v782 = vmul.f32 %v646, 0.2
        %v783 = vmul.f32 %v648, 0.2
        %v784 = vmul.f32 %v651, 0.2
        %v785 = vmul.f32 %v653, 0.2
        %v786 = vmul.f32 %v656, 0.2
        %v787 = vmul.f32 %v658, 0.2
        %v788 = vsel %vm660, %v501, %v724
        %v789 = vsel %vm661, %v503, %v725
        %v790 = vsel %vm662, %v506, %v726
        %v791 = vsel %vm663, %v508, %v727
        %v792 = vsel %vm664, %v511, %v728
        %v793 = vsel %vm665, %v513, %v729
        %v794 = vsel %vm666, %v516, %v730
        %v795 = vsel %vm667, %v518, %v731
        %v796 = vsel %vm668, %v521, %v732
        %v797 = vsel %vm669, %v523, %v733
        %v798 = vsel %vm670, %v526, %v734
        %v799 = vsel %vm671, %v528, %v735
        %v800 = vsel %vm672, %v531, %v736
        %v801 = vsel %vm673, %v533, %v737
        %v802 = vsel %vm674, %v536, %v738
        %v803 = vsel %vm675, %v538, %v739
        %v804 = vsel %vm676, %v541, %v740
        %v805 = vsel %vm677, %v543, %v741
        %v806 = vsel %vm678, %v546, %v742
        %v807 = vsel %vm679, %v548, %v743
        %v808 = vsel %vm680, %v551, %v744
        %v809 = vsel %vm681, %v553, %v745
        %v810 = vsel %vm682, %v556, %v746
        %v811 = vsel %vm683, %v558, %v747
        %v812 = vsel %vm684, %v561, %v748
        %v813 = vsel %vm685, %v563, %v749
        %v814 = vsel %vm686, %v566, %v750
        %v815 = vsel %vm687, %v568, %v751
        %v816 = vsel %vm688, %v571, %v752
        %v817 = vsel %vm689, %v573, %v753
        %v818 = vsel %vm690, %v576, %v754
        %v819 = vsel %vm691, %v578, %v755
        %v820 = vsel %vm692, %v581, %v756
        %v821 = vsel %vm693, %v583, %v757
        %v822 = vsel %vm694, %v586, %v758
        %v823 = vsel %vm695, %v588, %v759
        %v824 = vsel %vm696, %v591, %v760
        %v825 = vsel %vm697, %v593, %v761
        %v826 = vsel %vm698, %v596, %v762
        %v827 = vsel %vm699, %v598, %v763
        %v828 = vsel %vm700, %v601, %v764
        %v829 = vsel %vm701, %v603, %v765
        %v830 = vsel %vm702, %v606, %v766
        %v831 = vsel %vm703, %v608, %v767
        %v832 = vsel %vm704, %v611, %v768
        %v833 = vsel %vm705, %v613, %v769
        %v834 = vsel %vm706, %v616, %v770
        %v835 = vsel %vm707, %v618, %v771
        %v836 = vsel %vm708, %v621, %v772
        %v837 = vsel %vm709, %v623, %v773
        %v838 = vsel %vm710, %v626, %v774
        %v839 = vsel %vm711, %v628, %v775
        %v840 = vsel %vm712, %v631, %v776
        %v841 = vsel %vm713, %v633, %v777
        %v842 = vsel %vm714, %v636, %v778
        %v843 = vsel %vm715, %v638, %v779
        %v844 = vsel %vm716, %v641, %v780
        %v845 = vsel %vm717, %v643, %v781
        %v846 = vsel %vm718, %v646, %v782
        %v847 = vsel %vm719, %v648, %v783
        %v848 = vsel %vm720, %v651, %v784
        %v849 = vsel %vm721, %v653, %v785
        %v850 = vsel %vm722, %v656, %v786
        %v851 = vsel %vm723, %v658, %v787
        %v852 = vpack.c.bf16 %v788, %v788
        %v853 = vpack.c.bf16 %v789, %v789
        %v854 = vpack.c.bf16 %v790, %v790
        %v855 = vpack.c.bf16 %v791, %v791
        %v856 = vpack.c.bf16 %v792, %v792
        %v857 = vpack.c.bf16 %v793, %v793
        %v858 = vpack.c.bf16 %v794, %v794
        %v859 = vpack.c.bf16 %v795, %v795
        %v860 = vpack.c.bf16 %v796, %v796
        %v861 = vpack.c.bf16 %v797, %v797
        %v862 = vpack.c.bf16 %v798, %v798
        %v863 = vpack.c.bf16 %v799, %v799
        %v864 = vpack.c.bf16 %v800, %v800
        %v865 = vpack.c.bf16 %v801, %v801
        %v866 = vpack.c.bf16 %v802, %v802
        %v867 = vpack.c.bf16 %v803, %v803
        %v868 = vpack.c.bf16 %v804, %v804
        %v869 = vpack.c.bf16 %v805, %v805
        %v870 = vpack.c.bf16 %v806, %v806
        %v871 = vpack.c.bf16 %v807, %v807
        %v872 = vpack.c.bf16 %v808, %v808
        %v873 = vpack.c.bf16 %v809, %v809
        %v874 = vpack.c.bf16 %v810, %v810
        %v875 = vpack.c.bf16 %v811, %v811
        %v876 = vpack.c.bf16 %v812, %v812
        %v877 = vpack.c.bf16 %v813, %v813
        %v878 = vpack.c.bf16 %v814, %v814
        %v879 = vpack.c.bf16 %v815, %v815
        %v880 = vpack.c.bf16 %v816, %v816
        %v881 = vpack.c.bf16 %v817, %v817
        %v882 = vpack.c.bf16 %v818, %v818
        %v883 = vpack.c.bf16 %v819, %v819
        %v884 = vpack.c.bf16 %v820, %v820
        %v885 = vpack.c.bf16 %v821, %v821
        %v886 = vpack.c.bf16 %v822, %v822
        %v887 = vpack.c.bf16 %v823, %v823
        %v888 = vpack.c.bf16 %v824, %v824
        %v889 = vpack.c.bf16 %v825, %v825
        %v890 = vpack.c.bf16 %v826, %v826
        %v891 = vpack.c.bf16 %v827, %v827
        %v892 = vpack.c.bf16 %v828, %v828
        %v893 = vpack.c.bf16 %v829, %v829
        %v894 = vpack.c.bf16 %v830, %v830
        %v895 = vpack.c.bf16 %v831, %v831
        %v896 = vpack.c.bf16 %v832, %v832
        %v897 = vpack.c.bf16 %v833, %v833
        %v898 = vpack.c.bf16 %v834, %v834
        %v899 = vpack.c.bf16 %v835, %v835
        %v900 = vpack.c.bf16 %v836, %v836
        %v901 = vpack.c.bf16 %v837, %v837
        %v902 = vpack.c.bf16 %v838, %v838
        %v903 = vpack.c.bf16 %v839, %v839
        %v904 = vpack.c.bf16 %v840, %v840
        %v905 = vpack.c.bf16 %v841, %v841
        %v906 = vpack.c.bf16 %v842, %v842
        %v907 = vpack.c.bf16 %v843, %v843
        %v908 = vpack.c.bf16 %v844, %v844
        %v909 = vpack.c.bf16 %v845, %v845
        %v910 = vpack.c.bf16 %v846, %v846
        %v911 = vpack.c.bf16 %v847, %v847
        %v912 = vpack.c.bf16 %v848, %v848
        %v913 = vpack.c.bf16 %v849, %v849
        %v914 = vpack.c.bf16 %v850, %v850
        %v915 = vpack.c.bf16 %v851, %v851
        %916 = vst [vmem:[%s137] sm:$0xf] %v852
        %917 = vst [vmem:[%s137 + $0x4] sm:$0xf] %v853
        %918 = vst [vmem:[%s137 + $0x8] sm:$0xf] %v854
        %919 = vst [vmem:[%s137 + $0xc] sm:$0xf] %v855
        %920 = vst [vmem:[%s137 + $0x10] sm:$0xf] %v856
        %921 = vst [vmem:[%s137 + $0x14] sm:$0xf] %v857
        %922 = vst [vmem:[%s137 + $0x18] sm:$0xf] %v858
        %923 = vst [vmem:[%s137 + $0x1c] sm:$0xf] %v859
        %924 = vst [vmem:[%s137 + $0x20] sm:$0xf] %v860
        %925 = vst [vmem:[%s137 + $0x24] sm:$0xf] %v861
        %926 = vst [vmem:[%s137 + $0x28] sm:$0xf] %v862
        %927 = vst [vmem:[%s137 + $0x2c] sm:$0xf] %v863
        %928 = vst [vmem:[%s137 + $0x30] sm:$0xf] %v864
        %929 = vst [vmem:[%s137 + $0x34] sm:$0xf] %v865
        %930 = vst [vmem:[%s137 + $0x38] sm:$0xf] %v866
        %931 = vst [vmem:[%s137 + $0x3c] sm:$0xf] %v867
        %932 = vst [vmem:[%s137 + $0x40] sm:$0xf] %v868
        %933 = vst [vmem:[%s137 + $0x44] sm:$0xf] %v869
        %934 = vst [vmem:[%s137 + $0x48] sm:$0xf] %v870
        %935 = vst [vmem:[%s137 + $0x4c] sm:$0xf] %v871
        %936 = vst [vmem:[%s137 + $0x50] sm:$0xf] %v872
        %937 = vst [vmem:[%s137 + $0x54] sm:$0xf] %v873
        %938 = vst [vmem:[%s137 + $0x58] sm:$0xf] %v874
        %939 = vst [vmem:[%s137 + $0x5c] sm:$0xf] %v875
        %940 = vst [vmem:[%s137 + $0x60] sm:$0xf] %v876
        %941 = vst [vmem:[%s137 + $0x64] sm:$0xf] %v877
        %942 = vst [vmem:[%s137 + $0x68] sm:$0xf] %v878
        %943 = vst [vmem:[%s137 + $0x6c] sm:$0xf] %v879
        %944 = vst [vmem:[%s137 + $0x70] sm:$0xf] %v880
        %945 = vst [vmem:[%s137 + $0x74] sm:$0xf] %v881
        %946 = vst [vmem:[%s137 + $0x78] sm:$0xf] %v882
        %947 = vst [vmem:[%s137 + $0x7c] sm:$0xf] %v883
        %948 = vst [vmem:[%s137 + $0x80] sm:$0xf] %v884
        %949 = vst [vmem:[%s137 + $0x84] sm:$0xf] %v885
        %950 = vst [vmem:[%s137 + $0x88] sm:$0xf] %v886
        %951 = vst [vmem:[%s137 + $0x8c] sm:$0xf] %v887
        %952 = vst [vmem:[%s137 + $0x90] sm:$0xf] %v888
        %953 = vst [vmem:[%s137 + $0x94] sm:$0xf] %v889
        %954 = vst [vmem:[%s137 + $0x98] sm:$0xf] %v890
        %955 = vst [vmem:[%s137 + $0x9c] sm:$0xf] %v891
        %956 = vst [vmem:[%s137 + $0xa0] sm:$0xf] %v892
        %957 = vst [vmem:[%s137 + $0xa4] sm:$0xf] %v893
        %958 = vst [vmem:[%s137 + $0xa8] sm:$0xf] %v894
        %959 = vst [vmem:[%s137 + $0xac] sm:$0xf] %v895
        %960 = vst [vmem:[%s137 + $0xb0] sm:$0xf] %v896
        %961 = vst [vmem:[%s137 + $0xb4] sm:$0xf] %v897
        %962 = vst [vmem:[%s137 + $0xb8] sm:$0xf] %v898
        %963 = vst [vmem:[%s137 + $0xbc] sm:$0xf] %v899
        %964 = vst [vmem:[%s137 + $0xc0] sm:$0xf] %v900
        %965 = vst [vmem:[%s137 + $0xc4] sm:$0xf] %v901
        %966 = vst [vmem:[%s137 + $0xc8] sm:$0xf] %v902
        %967 = vst [vmem:[%s137 + $0xcc] sm:$0xf] %v903
        %968 = vst [vmem:[%s137 + $0xd0] sm:$0xf] %v904
        %969 = vst [vmem:[%s137 + $0xd4] sm:$0xf] %v905
        %970 = vst [vmem:[%s137 + $0xd8] sm:$0xf] %v906
        %971 = vst [vmem:[%s137 + $0xdc] sm:$0xf] %v907
        %972 = vst [vmem:[%s137 + $0xe0] sm:$0xf] %v908
        %973 = vst [vmem:[%s137 + $0xe4] sm:$0xf] %v909
        %974 = vst [vmem:[%s137 + $0xe8] sm:$0xf] %v910
        %975 = vst [vmem:[%s137 + $0xec] sm:$0xf] %v911
        %976 = vst [vmem:[%s137 + $0xf0] sm:$0xf] %v912
        %977 = vst [vmem:[%s137 + $0xf4] sm:$0xf] %v913
        %978 = vst [vmem:[%s137 + $0xf8] sm:$0xf] %v914
        %979 = vst [vmem:[%s137 + $0xfc] sm:$0xf] %v915
        %s980 = sand.u32 %s71, 1
        %s981 = scalar_lea.sflag [#allocation3], %s980
        %s982 = sand.u32 %s71, 1
        %s983 = smul.addr %s982, 256
        %s984 = scalar_lea.vmem [#allocation2], %s983
        // Predicated region
        $region29: #{tpu_custom_call.1} parent=27 // pred_check
          %p985 = pneg %p81
        $region30: #{tpu_custom_call.1} parent=27 // pred_check_branch
          %987 = sbr.rel (%p985) target = $region32
        $region31: #{tpu_custom_call.1} parent=27 // pred_region
          %s988 = smul.u32 64, %s16
          %990 = vsyncadd %s981, 0
          %s991 = smul.addr %s988, 4
          %s992 = scalar_lea.hbm %s2, %s991
          %s993 = sshll.u32 %s984, 4
          %s994 = int_to_ptr.vmem [resolvable:$true] %s993
          %s995 = sshll.u32 %s992, 4
          %s996 = int_to_ptr.hbm [resolvable:$true] %s995
          %1001 = dma.vmem_to_hbm [thread:$0]  %s994, 4096, %s996, %s981, 64, 64, 4
        $region32: #{tpu_custom_call.1} parent=27 // pred_fallthru
          _
      $region28: #{tpu_custom_call.1} parent=5 // pred_fallthru
        _
      %p1002 = scmp.le.s32.totalorder 2, %s11
      // Predicated region
      $region33: #{tpu_custom_call.1} parent=5 // pred_check
        %p1003 = pneg %p1002
      $region34: #{tpu_custom_call.1} parent=5 // pred_check_branch
        %1005 = sbr.rel (%p1003) target = $region36
      $region35: #{tpu_custom_call.1} parent=5 // pred_region
        %s1006 = ssub.s32 %s11, 2
        // Predicated region
        $region37: #{tpu_custom_call.1} parent=35 // pred_check
          %p1007 = pneg %p87
        $region38: #{tpu_custom_call.1} parent=35 // pred_check_branch
          %1009 = sbr.rel (%p1007) target = $region40
        $region39: #{tpu_custom_call.1} parent=35 // pred_region
          %s1010 = sand.u32 %s72, 1
          %s1011 = scalar_lea.sflag [#allocation3], %s1010
          %s1012 = sand.u32 %s72, 1
          %s1013 = smul.addr %s1012, 256
          %s1014 = scalar_lea.vmem [#allocation2], %s1013
          %1016 = dma.done %s1011, 4096
        $region40: #{tpu_custom_call.1} parent=35 // pred_fallthru
          _
      $region36: #{tpu_custom_call.1} parent=5 // pred_fallthru
        _
    $region6: #{tpu_custom_call.1} parent=1 // loop_footer
      %s15 = sadd.s32 1, %s11
    $region7: #{tpu_custom_call.1} parent=1 // loop_footer_branch
      %10 = sbr.rel target = $region3
    $region8: #{tpu_custom_call.1} parent=1 // loop_exit
      _
    %1017 = vsyncpa [#allocation3], 1
    %s1018 = scalar_lea.sflag [#allocation3], 1
    %1019 = vsyncpa %s1018, 1

</llo_original>
